<compile_context>
chip_gen: v5e
topology: v5e:2x2
jax: 0.10.0
libtpu: 0.0.40
codegen_flags: <defaults>
</compile_context>

<pallas_src>
import jax
import jax.numpy as jnp
from jax.experimental import pallas as pl
from jax.experimental.pallas import tpu as pltpu


def rbf_net_kernel(x_ref, ct2_ref, c_sq_ref, beta_ref, wt_ref, b_ref, out_ref):
    # x_ref:    (TN, D)      bf16  batch tile (streamed)
    # ct2_ref:  (D, Cpad)    bf16  (-2 * centers)^T, zero-padded in C (resident)
    # c_sq_ref: (1, Cpad)    f32   ||centers||^2, 0 in padded lanes
    # beta_ref: (1, Cpad)    f32   beta, 0 in padded lanes
    # wt_ref:   (Cpad, Kpad) bf16  linear weight^T, zero-padded
    # b_ref:    (1, Kpad)    f32   bias, zero-padded
    # out_ref:  (TN, Kpad)   f32
    x = x_ref[...]                                             # bf16
    xf = x.astype(jnp.float32)
    x_sq = jnp.sum(xf * xf, axis=-1, keepdims=True)            # (TN, 1), f32

    # -2 * x.c on the MXU (bf16 operands, f32 accumulation); -2 folded into ct2.
    xc2 = jnp.dot(x, ct2_ref[...],
                  preferred_element_type=jnp.float32)          # (TN, Cpad)

    # ||x||^2 + ||c||^2 - 2 x.c, clamped >= 0 against rounding.
    d2 = jnp.maximum(x_sq + c_sq_ref[...] + xc2, 0.0)
    dist = jnp.sqrt(d2)                                        # (TN, Cpad), f32
    radial = jnp.exp(-beta_ref[...] * dist)                    # padded lanes -> 1

    # Padded radial lanes hit zeroed wt rows, so they contribute nothing.
    out = jnp.dot(radial.astype(jnp.bfloat16), wt_ref[...],
                  preferred_element_type=jnp.float32) + b_ref[...]
    out_ref[...] = out.astype(out_ref.dtype)                   # (TN, Kpad)


def _round_up(v, m):
    return ((v + m - 1) // m) * m


def rbf_net_forward(x, centers, beta, w, b, *, block_n=1024):
    N, D = x.shape
    C = centers.shape[0]
    K = w.shape[0]
    Cpad = _round_up(C, 128)                      # lane-dense centers axis
    Kpad = _round_up(K, 128)                      # lane-dense output

    # ---- weight-only prep (constant across calls; hoisted out of the kernel) ----
    centers_f32 = centers.astype(jnp.float32)
    ct2 = jnp.zeros((D, Cpad), jnp.bfloat16).at[:, :C].set(
        (-2.0 * centers_f32).T.astype(jnp.bfloat16))           # (D, Cpad), MXU rhs
    c_sq = jnp.zeros((1, Cpad), jnp.float32).at[:, :C].set(
        jnp.sum(centers_f32 * centers_f32, axis=-1)[None, :])  # (1, Cpad)
    beta_pad = jnp.zeros((1, Cpad), jnp.float32).at[:, :C].set(
        beta.astype(jnp.float32).reshape(1, C))                # (1, Cpad)
    wt = jnp.zeros((Cpad, Kpad), jnp.bfloat16).at[:C, :K].set(
        w.astype(jnp.float32).T.astype(jnp.bfloat16))          # (Cpad, Kpad)
    b_pad = jnp.zeros((1, Kpad), jnp.float32).at[:, :K].set(
        b.astype(jnp.float32).reshape(1, K))                   # (1, Kpad)

    # ---- x is streamed as bf16 (halves HBM read; kernel upcasts for x_sq) ----
    x_bf16 = x if x.dtype == jnp.bfloat16 else x.astype(jnp.bfloat16)

    # ---- batch tiling: weights stay resident, x/out blocks stream over N ----
    # Big tiles amortize per-step overhead; when N is small, cap at ~N/2 (mult.
    # of 8) so the grid has >=2 steps and v7x's two TensorCores split the work.
    if N > block_n:
        TN = block_n
    elif N >= 16:
        TN = min(_round_up(pl.cdiv(N, 2), 8), N)
    else:
        TN = N
    grid = (pl.cdiv(N, TN),)

    cost = pl.CostEstimate(
        flops=2 * N * D * Cpad + 2 * N * Cpad * Kpad,
        transcendentals=N * Cpad,
        bytes_accessed=(N * D * 2 + N * Kpad * 4
                        + D * Cpad * 2 + Cpad * Kpad * 2 + 3 * Cpad * 4),
    )

    out_padded = pl.pallas_call(
        rbf_net_kernel,
        out_shape=jax.ShapeDtypeStruct((N, Kpad), jnp.float32),
        grid=grid,
        in_specs=[
            pl.BlockSpec((TN, D), lambda i: (i, 0)),           # x tile (streamed)
            pl.BlockSpec((D, Cpad), lambda i: (0, 0)),         # -2*centers^T (resident)
            pl.BlockSpec((1, Cpad), lambda i: (0, 0)),         # ||c||^2
            pl.BlockSpec((1, Cpad), lambda i: (0, 0)),         # beta
            pl.BlockSpec((Cpad, Kpad), lambda i: (0, 0)),      # W^T (padded, bf16)
            pl.BlockSpec((1, Kpad), lambda i: (0, 0)),         # bias (padded)
        ],
        out_specs=pl.BlockSpec((TN, Kpad), lambda i: (i, 0)),
        compiler_params=pltpu.CompilerParams(
            dimension_semantics=("parallel",),                 # v7x: 2 TCs split N
            vmem_limit_bytes=32 * 1024 * 1024,                 # headroom on v5e
        ),
        cost_estimate=cost,
    )(x_bf16, ct2, c_sq, beta_pad, wt, b_pad)

    return out_padded[:, :K]


def rbf_net_reference(x, centers, beta, w, b):
    # Pure-JAX reference mirroring the PyTorch forward exactly (f32 throughout).
    diff = centers[None, :, :] - x[:, None, :]           # (N, C, D)
    dist = jnp.sqrt(jnp.sum(diff * diff, axis=2))        # (N, C)
    radial = jnp.exp(-beta * dist)                       # (N, C)
    return radial @ w.T + b[None, :]                     # (N, K)


if __name__ == "__main__":
    num_centers = 16
    num_classes = 10
    batch = 8
    D = 28 * 28

    key = jax.random.PRNGKey(0)
    k_x, k_c, k_w = jax.random.split(key, 3)

    # Deterministic parameter init matching the module's __init__:
    #   centers ~ U[0, 1), beta = ones/10, linear.weight ~ N(0, 0.02), bias = 0
    centers = jax.random.uniform(k_c, (num_centers, D), dtype=jnp.float32)
    beta = jnp.ones((1, num_centers), dtype=jnp.float32) / 10.0
    w = 0.02 * jax.random.normal(k_w, (num_classes, num_centers), dtype=jnp.float32)
    b = jnp.zeros((num_classes,), dtype=jnp.float32)

    # Input: MNIST-style batch flattened to (N, 784) (module's .view(n, -1)).
    x = jax.random.normal(k_x, (batch, D), dtype=jnp.float32)

    out = rbf_net_forward(x, centers, beta, w, b)
    out = jax.block_until_ready(out)

    ref = rbf_net_reference(x, centers, beta, w, b)
    assert out.shape == (batch, num_classes)
    # x is streamed in bf16 and both matmuls use bf16 operands (f32 accumulation),
    # so the tolerance is looser than a pure-f32 path.
    assert jnp.allclose(out, ref, atol=2e-3, rtol=2e-2), float(
        jnp.max(jnp.abs(out - ref)))

    print("KERNEL_OK")
</pallas_src>

<mosaic_0001>
module attributes {stable_mosaic.version = 11 : i64} {
  func.func @rbf_net_kernel(%arg0: i32, %arg1: memref<8x784xbf16, #tpu.memory_space<vmem>>, %arg2: memref<784x128xbf16, #tpu.memory_space<vmem>>, %arg3: memref<1x128xf32, #tpu.memory_space<vmem>>, %arg4: memref<1x128xf32, #tpu.memory_space<vmem>>, %arg5: memref<128x128xbf16, #tpu.memory_space<vmem>>, %arg6: memref<1x128xf32, #tpu.memory_space<vmem>>, %arg7: memref<8x128xf32, #tpu.memory_space<vmem>>) attributes {dimension_semantics = [#tpu.dimension_semantics<parallel>], iteration_bounds = array<i64: 1>, scalar_prefetch = 0 : i64, scratch_operands = 0 : i64, tpu.core_type = #tpu.core_type<tc>, window_params = [{transform_indices = @transform_0, window_bounds = array<i64: 8, 784>}, {pipeline_mode = #tpu.pipeline_mode<synchronous>, transform_indices = @transform_1, window_bounds = array<i64: 784, 128>}, {pipeline_mode = #tpu.pipeline_mode<synchronous>, transform_indices = @transform_2, window_bounds = array<i64: 1, 128>}, {pipeline_mode = #tpu.pipeline_mode<synchronous>, transform_indices = @transform_3, window_bounds = array<i64: 1, 128>}, {pipeline_mode = #tpu.pipeline_mode<synchronous>, transform_indices = @transform_4, window_bounds = array<i64: 128, 128>}, {pipeline_mode = #tpu.pipeline_mode<synchronous>, transform_indices = @transform_5, window_bounds = array<i64: 1, 128>}, {transform_indices = @transform_6, window_bounds = array<i64: 8, 128>}]} {
    %c0 = arith.constant 0 : index
    %c0_0 = arith.constant 0 : index
    %0 = vector.load %arg1[%c0, %c0_0] : memref<8x784xbf16, #tpu.memory_space<vmem>>, vector<8x784xbf16>
    %1 = arith.extf %0 : vector<8x784xbf16> to vector<8x784xf32>
    %2 = arith.mulf %1, %1 : vector<8x784xf32>
    %cst = arith.constant dense<0.000000e+00> : vector<8xf32>
    %3 = vector.multi_reduction <add>, %2, %cst [1] : vector<8x784xf32> to vector<8xf32>
    %4 = vector.shape_cast %3 : vector<8xf32> to vector<8x1xf32>
    %c0_1 = arith.constant 0 : index
    %c0_2 = arith.constant 0 : index
    %5 = vector.load %arg2[%c0_1, %c0_2] : memref<784x128xbf16, #tpu.memory_space<vmem>>, vector<784x128xbf16>
    %cst_3 = arith.constant dense<0.000000e+00> : vector<8x128xf32>
    %6 = tpu.matmul %0, %5, %cst_3 {dimension_numbers = #tpu.dot_dimension_numbers<[1], [0], [0], [1], [0, 0, 1, 1], [], []>} : vector<8x784xbf16>, vector<784x128xbf16>, vector<8x128xf32> -> vector<8x128xf32>
    %c0_4 = arith.constant 0 : index
    %c0_5 = arith.constant 0 : index
    %7 = vector.load %arg3[%c0_4, %c0_5] : memref<1x128xf32, #tpu.memory_space<vmem>>, vector<1x128xf32>
    %8 = vector.broadcast %4 : vector<8x1xf32> to vector<8x128xf32>
    %9 = vector.broadcast %7 : vector<1x128xf32> to vector<8x128xf32>
    %10 = arith.addf %8, %9 : vector<8x128xf32>
    %11 = arith.addf %10, %6 : vector<8x128xf32>
    %cst_6 = arith.constant 0.000000e+00 : f32
    %12 = vector.broadcast %cst_6 : f32 to vector<8x128xf32>
    %13 = arith.maximumf %11, %12 : vector<8x128xf32>
    %14 = math.sqrt %13 : vector<8x128xf32>
    %c0_7 = arith.constant 0 : index
    %c0_8 = arith.constant 0 : index
    %15 = vector.load %arg4[%c0_7, %c0_8] : memref<1x128xf32, #tpu.memory_space<vmem>>, vector<1x128xf32>
    %cst_9 = arith.constant 0.000000e+00 : f32
    %16 = vector.broadcast %cst_9 : f32 to vector<1x128xf32>
    %17 = arith.subf %16, %15 : vector<1x128xf32>
    %18 = vector.broadcast %17 : vector<1x128xf32> to vector<8x128xf32>
    %19 = arith.mulf %18, %14 : vector<8x128xf32>
    %20 = math.exp %19 : vector<8x128xf32>
    %21 = arith.truncf %20 : vector<8x128xf32> to vector<8x128xbf16>
    %c0_10 = arith.constant 0 : index
    %c0_11 = arith.constant 0 : index
    %22 = vector.load %arg5[%c0_10, %c0_11] : memref<128x128xbf16, #tpu.memory_space<vmem>>, vector<128x128xbf16>
    %cst_12 = arith.constant dense<0.000000e+00> : vector<8x128xf32>
    %23 = tpu.matmul %21, %22, %cst_12 {dimension_numbers = #tpu.dot_dimension_numbers<[1], [0], [0], [1], [0, 0, 1, 1], [], []>} : vector<8x128xbf16>, vector<128x128xbf16>, vector<8x128xf32> -> vector<8x128xf32>
    %c0_13 = arith.constant 0 : index
    %c0_14 = arith.constant 0 : index
    %24 = vector.load %arg6[%c0_13, %c0_14] : memref<1x128xf32, #tpu.memory_space<vmem>>, vector<1x128xf32>
    %25 = vector.broadcast %24 : vector<1x128xf32> to vector<8x128xf32>
    %26 = arith.addf %23, %25 : vector<8x128xf32>
    %c0_15 = arith.constant 0 : index
    %c0_16 = arith.constant 0 : index
    %27 = vector.load %arg7[%c0_15, %c0_16] : memref<8x128xf32, #tpu.memory_space<vmem>>, vector<8x128xf32>
    tpu.vector_store %arg7[%c0_15, %c0_16], %26 {strides = array<i32>} : memref<8x128xf32, #tpu.memory_space<vmem>>, vector<8x128xf32>,
    return
  }
  func.func @transform_0(%arg0: i32) -> (i32, i32) {
    %c0_i32 = arith.constant 0 : i32
    %c0_i32_0 = arith.constant 0 : i32
    return %arg0, %c0_i32 : i32, i32
  }
  func.func @transform_1(%arg0: i32) -> (i32, i32) {
    %c0_i32 = arith.constant 0 : i32
    %c0_i32_0 = arith.constant 0 : i32
    %c0_i32_1 = arith.constant 0 : i32
    return %c0_i32, %c0_i32_0 : i32, i32
  }
  func.func @transform_2(%arg0: i32) -> (i32, i32) {
    %c0_i32 = arith.constant 0 : i32
    %c0_i32_0 = arith.constant 0 : i32
    %c0_i32_1 = arith.constant 0 : i32
    return %c0_i32, %c0_i32_0 : i32, i32
  }
  func.func @transform_3(%arg0: i32) -> (i32, i32) {
    %c0_i32 = arith.constant 0 : i32
    %c0_i32_0 = arith.constant 0 : i32
    %c0_i32_1 = arith.constant 0 : i32
    return %c0_i32, %c0_i32_0 : i32, i32
  }
  func.func @transform_4(%arg0: i32) -> (i32, i32) {
    %c0_i32 = arith.constant 0 : i32
    %c0_i32_0 = arith.constant 0 : i32
    %c0_i32_1 = arith.constant 0 : i32
    return %c0_i32, %c0_i32_0 : i32, i32
  }
  func.func @transform_5(%arg0: i32) -> (i32, i32) {
    %c0_i32 = arith.constant 0 : i32
    %c0_i32_0 = arith.constant 0 : i32
    %c0_i32_1 = arith.constant 0 : i32
    return %c0_i32, %c0_i32_0 : i32, i32
  }
  func.func @transform_6(%arg0: i32) -> (i32, i32) {
    %c0_i32 = arith.constant 0 : i32
    %c0_i32_0 = arith.constant 0 : i32
    return %arg0, %c0_i32 : i32, i32
  }
}

</mosaic_0001>

<llo_original>
// kernel: tpu_custom_call.1
$region0: #{tpu_custom_call.1}
  #allocation0 [shape = 'u32[]', space=smem, size = 0x4, offset = 0x4, fixed_abs, tag = 'smem constant byte address 0x4 - core index']
  #allocation1 [shape = 'u32[72,128]{1,0:T(1,128)}', space=vmem, size = 0x9000, scoped, tag = 'internal scratch']
  %s0 = inlined_call_operand.hbm [shape: bf16[8,784], index: 0, kind: input, shape index: {}]
  %s1 = inlined_call_operand.hbm [shape: bf16[784,128], index: 1, kind: input, shape index: {}]
  %s2 = inlined_call_operand.vmem [shape: f32[1,128], index: 2, kind: input, shape index: {}]
  %s3 = inlined_call_operand.vmem [shape: f32[1,128], index: 3, kind: input, shape index: {}]
  %s4 = inlined_call_operand.hbm [shape: bf16[128,128], index: 4, kind: input, shape index: {}]
  %s5 = inlined_call_operand.vmem [shape: f32[1,128], index: 5, kind: input, shape index: {}]
  %s6 = inlined_call_operand.hbm [shape: f32[8,128], index: 6, kind: output, shape index: {}]
  %s7 = sld [smem:[#allocation0]]
  $region46: #{tpu_custom_call.1} parent=0
    _
  %s9 = ssub.s32 1, %s7
  %s10 = scalar_select 0, %s9, %s7
  $region1: #{tpu_custom_call.1} parent=0
    #allocation2 [shape = 'u8[14336]{0}', space=vmem, size = 0x3800, scoped, tag = 'input window, operand 0, single buffered']
    #allocation3 [shape = 's32[1]{0}', space=sflag, size = 0x4, scoped, tag = 'scoped memory for tpu_custom_call.1']
    #allocation4 [shape = 's32[1]{0}', space=sflag, size = 0x4, scoped, tag = 'scoped memory for tpu_custom_call.1']
    #allocation5 [shape = 'u8[200704]{0}', space=vmem, size = 0x31000, scoped, tag = 'input window, operand 1, single buffered']
    #allocation6 [shape = 's32[1]{0}', space=sflag, size = 0x4, scoped, tag = 'scoped memory for tpu_custom_call.1']
    #allocation7 [shape = 'u8[32768]{0}', space=vmem, size = 0x8000, scoped, tag = 'input window, operand 4, single buffered']
    #allocation8 [shape = 'u8[4096]{0}', space=vmem, size = 0x1000, scoped, tag = 'output window, operand 0, single buffered']
    %11 = vsyncpa [#allocation3], 0
    %12 = vsyncpa [#allocation6], 0
    %13 = vsyncpa [#allocation4], 0
    // Predicated region
    $region2: #{tpu_custom_call.1} parent=1 // pred_check
      _
    $region3: #{tpu_custom_call.1} parent=1 // pred_check_branch
      %15 = sbr.rel (0) target = $region5
    $region4: #{tpu_custom_call.1} parent=1 // pred_region
      %17 = vsyncadd [#allocation3], 0
      %s19 = sshll.u32 %s0, 4
      %s20 = int_to_ptr.hbm [resolvable:$true] %s19
      %s21 = sshll.u32 [#allocation2], 4
      %s22 = int_to_ptr.vmem [resolvable:$true] %s21
      %24 = dma.hbm_to_vmem [thread:$0]  %s20, 448, %s22, [#allocation3]
    $region5: #{tpu_custom_call.1} parent=1 // pred_fallthru
      _
    // Predicated region
    $region6: #{tpu_custom_call.1} parent=1 // pred_check
      _
    $region7: #{tpu_custom_call.1} parent=1 // pred_check_branch
      %26 = sbr.rel (0) target = $region9
    $region8: #{tpu_custom_call.1} parent=1 // pred_region
      %28 = vsyncadd [#allocation6], 0
      %s29 = sshll.u32 %s1, 4
      %s30 = int_to_ptr.hbm [resolvable:$true] %s29
      %s31 = sshll.u32 [#allocation5], 4
      %s32 = int_to_ptr.vmem [resolvable:$true] %s31
      %37 = dma.hbm_to_vmem [thread:$0]  %s30, 6272, %s32, [#allocation6], 64, 64, 4
    $region9: #{tpu_custom_call.1} parent=1 // pred_fallthru
      _
    // Predicated region
    $region10: #{tpu_custom_call.1} parent=1 // pred_check
      _
    $region11: #{tpu_custom_call.1} parent=1 // pred_check_branch
      %39 = sbr.rel (0) target = $region13
    $region12: #{tpu_custom_call.1} parent=1 // pred_region
      _
    $region13: #{tpu_custom_call.1} parent=1 // pred_fallthru
      _
    // Predicated region
    $region14: #{tpu_custom_call.1} parent=1 // pred_check
      _
    $region15: #{tpu_custom_call.1} parent=1 // pred_check_branch
      %41 = sbr.rel (0) target = $region17
    $region16: #{tpu_custom_call.1} parent=1 // pred_region
      _
    $region17: #{tpu_custom_call.1} parent=1 // pred_fallthru
      _
    // Predicated region
    $region18: #{tpu_custom_call.1} parent=1 // pred_check
      _
    $region19: #{tpu_custom_call.1} parent=1 // pred_check_branch
      %43 = sbr.rel (0) target = $region21
    $region20: #{tpu_custom_call.1} parent=1 // pred_region
      %45 = vsyncadd [#allocation6], 0
      %s46 = sshll.u32 %s4, 4
      %s47 = int_to_ptr.hbm [resolvable:$true] %s46
      %s48 = sshll.u32 [#allocation7], 4
      %s49 = int_to_ptr.vmem [resolvable:$true] %s48
      %54 = dma.hbm_to_vmem [thread:$0]  %s47, 1024, %s49, [#allocation6], 64, 64, 4
    $region21: #{tpu_custom_call.1} parent=1 // pred_fallthru
      _
    // Predicated region
    $region22: #{tpu_custom_call.1} parent=1 // pred_check
      _
    $region23: #{tpu_custom_call.1} parent=1 // pred_check_branch
      %56 = sbr.rel (0) target = $region25
    $region24: #{tpu_custom_call.1} parent=1 // pred_region
      _
    $region25: #{tpu_custom_call.1} parent=1 // pred_fallthru
      _
    // Predicated region
    $region26: #{tpu_custom_call.1} parent=1 // pred_check
      _
    $region27: #{tpu_custom_call.1} parent=1 // pred_check_branch
      %58 = sbr.rel (0) target = $region29
    $region28: #{tpu_custom_call.1} parent=1 // pred_region
      %60 = dma.done [#allocation3], 448
    $region29: #{tpu_custom_call.1} parent=1 // pred_fallthru
      _
    // Predicated region
    $region30: #{tpu_custom_call.1} parent=1 // pred_check
      _
    $region31: #{tpu_custom_call.1} parent=1 // pred_check_branch
      %62 = sbr.rel (0) target = $region33
    $region32: #{tpu_custom_call.1} parent=1 // pred_region
      %64 = dma.done [#allocation6], 6272
    $region33: #{tpu_custom_call.1} parent=1 // pred_fallthru
      _
    // Predicated region
    $region34: #{tpu_custom_call.1} parent=1 // pred_check
      _
    $region35: #{tpu_custom_call.1} parent=1 // pred_check_branch
      %66 = sbr.rel (0) target = $region37
    $region36: #{tpu_custom_call.1} parent=1 // pred_region
      %68 = dma.done [#allocation6], 1024
    $region37: #{tpu_custom_call.1} parent=1 // pred_fallthru
      _
    %v70 = vld [vmem:[#allocation2] sm:$0xff]
    %v71 = vld [vmem:[#allocation2 + $0x8] sm:$0xff]
    %v72 = vld [vmem:[#allocation2 + $0x10] sm:$0xff]
    %v73 = vld [vmem:[#allocation2 + $0x18] sm:$0xf]
    %v74 = vunpack.c.l.bf16 %v70
    %v75 = vunpack.c.h.bf16 %v70
    %v76 = vunpack.c.l.bf16 %v71
    %v77 = vunpack.c.h.bf16 %v71
    %v78 = vunpack.c.l.bf16 %v72
    %v79 = vunpack.c.h.bf16 %v72
    %v80 = vunpack.c.l.bf16 %v73
    %v81 = vmul.f32 %v74, %v74
    %v82 = vmul.f32 %v75, %v75
    %v83 = vmul.f32 %v76, %v76
    %v84 = vmul.f32 %v77, %v77
    %v85 = vmul.f32 %v78, %v78
    %v86 = vmul.f32 %v79, %v79
    %v87 = vmul.f32 %v80, %v80
    %v88 = vadd.f32 %v81, %v82
    %v89 = vadd.f32 %v88, %v83
    %v90 = vadd.f32 %v89, %v84
    %v91 = vadd.f32 %v90, %v85
    %v92 = vadd.f32 %v91, %v86
    %vm93 = vcmask 130048
    %v94 = vsel %vm93, %v87, 0.0
    %v95 = vadd.f32 %v92, %v94
    %96 = vadd.xlane.f32.xlu0 %v95
    %v97 = vpop.xlane.xlu0 %96
    %v98 = vld [vmem:[#allocation5] sm:$0xf]
    %v99 = vld [vmem:[#allocation5 + $0x4] sm:$0xf]
    %v100 = vld [vmem:[#allocation5 + $0x8] sm:$0xf]
    %v101 = vld [vmem:[#allocation5 + $0xc] sm:$0xf]
    %v102 = vld [vmem:[#allocation5 + $0x10] sm:$0xf]
    %v103 = vld [vmem:[#allocation5 + $0x14] sm:$0xf]
    %v104 = vld [vmem:[#allocation5 + $0x18] sm:$0xf]
    %v105 = vld [vmem:[#allocation5 + $0x1c] sm:$0xf]
    %v106 = vld [vmem:[#allocation5 + $0x20] sm:$0xf]
    %v107 = vld [vmem:[#allocation5 + $0x24] sm:$0xf]
    %v108 = vld [vmem:[#allocation5 + $0x28] sm:$0xf]
    %v109 = vld [vmem:[#allocation5 + $0x2c] sm:$0xf]
    %v110 = vld [vmem:[#allocation5 + $0x30] sm:$0xf]
    %v111 = vld [vmem:[#allocation5 + $0x34] sm:$0xf]
    %v112 = vld [vmem:[#allocation5 + $0x38] sm:$0xf]
    %v113 = vld [vmem:[#allocation5 + $0x3c] sm:$0xf]
    %v114 = vld [vmem:[#allocation5 + $0x40] sm:$0xf]
    %v115 = vld [vmem:[#allocation5 + $0x44] sm:$0xf]
    %v116 = vld [vmem:[#allocation5 + $0x48] sm:$0xf]
    %v117 = vld [vmem:[#allocation5 + $0x4c] sm:$0xf]
    %v118 = vld [vmem:[#allocation5 + $0x50] sm:$0xf]
    %v119 = vld [vmem:[#allocation5 + $0x54] sm:$0xf]
    %v120 = vld [vmem:[#allocation5 + $0x58] sm:$0xf]
    %v121 = vld [vmem:[#allocation5 + $0x5c] sm:$0xf]
    %v122 = vld [vmem:[#allocation5 + $0x60] sm:$0xf]
    %v123 = vld [vmem:[#allocation5 + $0x64] sm:$0xf]
    %v124 = vld [vmem:[#allocation5 + $0x68] sm:$0xf]
    %v125 = vld [vmem:[#allocation5 + $0x6c] sm:$0xf]
    %v126 = vld [vmem:[#allocation5 + $0x70] sm:$0xf]
    %v127 = vld [vmem:[#allocation5 + $0x74] sm:$0xf]
    %v128 = vld [vmem:[#allocation5 + $0x78] sm:$0xf]
    %v129 = vld [vmem:[#allocation5 + $0x7c] sm:$0xf]
    %v130 = vld [vmem:[#allocation5 + $0x80] sm:$0xf]
    %v131 = vld [vmem:[#allocation5 + $0x84] sm:$0xf]
    %v132 = vld [vmem:[#allocation5 + $0x88] sm:$0xf]
    %v133 = vld [vmem:[#allocation5 + $0x8c] sm:$0xf]
    %v134 = vld [vmem:[#allocation5 + $0x90] sm:$0xf]
    %v135 = vld [vmem:[#allocation5 + $0x94] sm:$0xf]
    %v136 = vld [vmem:[#allocation5 + $0x98] sm:$0xf]
    %v137 = vld [vmem:[#allocation5 + $0x9c] sm:$0xf]
    %v138 = vld [vmem:[#allocation5 + $0xa0] sm:$0xf]
    %v139 = vld [vmem:[#allocation5 + $0xa4] sm:$0xf]
    %v140 = vld [vmem:[#allocation5 + $0xa8] sm:$0xf]
    %v141 = vld [vmem:[#allocation5 + $0xac] sm:$0xf]
    %v142 = vld [vmem:[#allocation5 + $0xb0] sm:$0xf]
    %v143 = vld [vmem:[#allocation5 + $0xb4] sm:$0xf]
    %v144 = vld [vmem:[#allocation5 + $0xb8] sm:$0xf]
    %v145 = vld [vmem:[#allocation5 + $0xbc] sm:$0xf]
    %v146 = vld [vmem:[#allocation5 + $0xc0] sm:$0xf]
    %v147 = vld [vmem:[#allocation5 + $0xc4] sm:$0xf]
    %v148 = vld [vmem:[#allocation5 + $0xc8] sm:$0xf]
    %v149 = vld [vmem:[#allocation5 + $0xcc] sm:$0xf]
    %v150 = vld [vmem:[#allocation5 + $0xd0] sm:$0xf]
    %v151 = vld [vmem:[#allocation5 + $0xd4] sm:$0xf]
    %v152 = vld [vmem:[#allocation5 + $0xd8] sm:$0xf]
    %v153 = vld [vmem:[#allocation5 + $0xdc] sm:$0xf]
    %v154 = vld [vmem:[#allocation5 + $0xe0] sm:$0xf]
    %v155 = vld [vmem:[#allocation5 + $0xe4] sm:$0xf]
    %v156 = vld [vmem:[#allocation5 + $0xe8] sm:$0xf]
    %v157 = vld [vmem:[#allocation5 + $0xec] sm:$0xf]
    %v158 = vld [vmem:[#allocation5 + $0xf0] sm:$0xf]
    %v159 = vld [vmem:[#allocation5 + $0xf4] sm:$0xf]
    %v160 = vld [vmem:[#allocation5 + $0xf8] sm:$0xf]
    %v161 = vld [vmem:[#allocation5 + $0xfc] sm:$0xf]
    %v162 = vld [vmem:[#allocation5 + $0x100] sm:$0xf]
    %v163 = vld [vmem:[#allocation5 + $0x104] sm:$0xf]
    %v164 = vld [vmem:[#allocation5 + $0x108] sm:$0xf]
    %v165 = vld [vmem:[#allocation5 + $0x10c] sm:$0xf]
    %v166 = vld [vmem:[#allocation5 + $0x110] sm:$0xf]
    %v167 = vld [vmem:[#allocation5 + $0x114] sm:$0xf]
    %v168 = vld [vmem:[#allocation5 + $0x118] sm:$0xf]
    %v169 = vld [vmem:[#allocation5 + $0x11c] sm:$0xf]
    %v170 = vld [vmem:[#allocation5 + $0x120] sm:$0xf]
    %v171 = vld [vmem:[#allocation5 + $0x124] sm:$0xf]
    %v172 = vld [vmem:[#allocation5 + $0x128] sm:$0xf]
    %v173 = vld [vmem:[#allocation5 + $0x12c] sm:$0xf]
    %v174 = vld [vmem:[#allocation5 + $0x130] sm:$0xf]
    %v175 = vld [vmem:[#allocation5 + $0x134] sm:$0xf]
    %v176 = vld [vmem:[#allocation5 + $0x138] sm:$0xf]
    %v177 = vld [vmem:[#allocation5 + $0x13c] sm:$0xf]
    %v178 = vld [vmem:[#allocation5 + $0x140] sm:$0xf]
    %v179 = vld [vmem:[#allocation5 + $0x144] sm:$0xf]
    %v180 = vld [vmem:[#allocation5 + $0x148] sm:$0xf]
    %v181 = vld [vmem:[#allocation5 + $0x14c] sm:$0xf]
    %v182 = vld [vmem:[#allocation5 + $0x150] sm:$0xf]
    %v183 = vld [vmem:[#allocation5 + $0x154] sm:$0xf]
    %v184 = vld [vmem:[#allocation5 + $0x158] sm:$0xf]
    %v185 = vld [vmem:[#allocation5 + $0x15c] sm:$0xf]
    %v186 = vld [vmem:[#allocation5 + $0x160] sm:$0xf]
    %v187 = vld [vmem:[#allocation5 + $0x164] sm:$0xf]
    %v188 = vld [vmem:[#allocation5 + $0x168] sm:$0xf]
    %v189 = vld [vmem:[#allocation5 + $0x16c] sm:$0xf]
    %v190 = vld [vmem:[#allocation5 + $0x170] sm:$0xf]
    %v191 = vld [vmem:[#allocation5 + $0x174] sm:$0xf]
    %v192 = vld [vmem:[#allocation5 + $0x178] sm:$0xf]
    %v193 = vld [vmem:[#allocation5 + $0x17c] sm:$0xf]
    %v194 = vld [vmem:[#allocation5 + $0x180] sm:$0xf]
    %v195 = vld [vmem:[#allocation5 + $0x184] sm:$0xf]
    %v200 = vunpack.c.l.b16 %v70
    %v201 = vunpack.c.h.b16 %v70
    %v202 = vunpack.c.l.b16 %v71
    %v203 = vunpack.c.h.b16 %v71
    %v204 = vunpack.c.l.b16 %v72
    %v205 = vunpack.c.h.b16 %v72
    %v206 = vunpack.c.l.b16 %v73
    %v207 = vpack.c.b16 %v200, %v200
    %v208 = vpack.c.b16 %v201, %v201
    %v209 = vpack.c.b16 %v202, %v202
    %v210 = vpack.c.b16 %v203, %v203
    %v211 = vpack.c.b16 %v204, %v204
    %v212 = vpack.c.b16 %v205, %v205
    %v213 = vpack.c.b16 %v206, %v206
    %v318 = vunpack.c.l.b16 %v98
    %v319 = vunpack.c.l.b16 %v99
    %v320 = vunpack.c.l.b16 %v100
    %v321 = vunpack.c.l.b16 %v101
    %v322 = vunpack.c.l.b16 %v102
    %v323 = vunpack.c.l.b16 %v103
    %v324 = vunpack.c.l.b16 %v104
    %v325 = vunpack.c.l.b16 %v105
    %v326 = vunpack.c.l.b16 %v106
    %v327 = vunpack.c.l.b16 %v107
    %v328 = vunpack.c.l.b16 %v108
    %v329 = vunpack.c.l.b16 %v109
    %v330 = vunpack.c.l.b16 %v110
    %v331 = vunpack.c.l.b16 %v111
    %v332 = vunpack.c.l.b16 %v112
    %v333 = vunpack.c.l.b16 %v113
    %v334 = vunpack.c.l.b16 %v114
    %v335 = vunpack.c.l.b16 %v115
    %v336 = vunpack.c.l.b16 %v116
    %v337 = vunpack.c.l.b16 %v117
    %v338 = vunpack.c.l.b16 %v118
    %v339 = vunpack.c.l.b16 %v119
    %v340 = vunpack.c.l.b16 %v120
    %v341 = vunpack.c.l.b16 %v121
    %v342 = vunpack.c.l.b16 %v122
    %v343 = vunpack.c.l.b16 %v123
    %v344 = vunpack.c.l.b16 %v124
    %v345 = vunpack.c.l.b16 %v125
    %v346 = vunpack.c.l.b16 %v126
    %v347 = vunpack.c.l.b16 %v127
    %v348 = vunpack.c.l.b16 %v128
    %v349 = vunpack.c.l.b16 %v129
    %v350 = vunpack.c.l.b16 %v130
    %v351 = vunpack.c.l.b16 %v131
    %v352 = vunpack.c.l.b16 %v132
    %v353 = vunpack.c.l.b16 %v133
    %v354 = vunpack.c.l.b16 %v134
    %v355 = vunpack.c.l.b16 %v135
    %v356 = vunpack.c.l.b16 %v136
    %v357 = vunpack.c.l.b16 %v137
    %v358 = vunpack.c.l.b16 %v138
    %v359 = vunpack.c.l.b16 %v139
    %v360 = vunpack.c.l.b16 %v140
    %v361 = vunpack.c.l.b16 %v141
    %v362 = vunpack.c.l.b16 %v142
    %v363 = vunpack.c.l.b16 %v143
    %v364 = vunpack.c.l.b16 %v144
    %v365 = vunpack.c.l.b16 %v145
    %v366 = vunpack.c.l.b16 %v146
    %v367 = vunpack.c.l.b16 %v147
    %v368 = vunpack.c.l.b16 %v148
    %v369 = vunpack.c.l.b16 %v149
    %v370 = vunpack.c.l.b16 %v150
    %v371 = vunpack.c.l.b16 %v151
    %v372 = vunpack.c.l.b16 %v152
    %v373 = vunpack.c.l.b16 %v153
    %v374 = vunpack.c.l.b16 %v154
    %v375 = vunpack.c.l.b16 %v155
    %v376 = vunpack.c.l.b16 %v156
    %v377 = vunpack.c.l.b16 %v157
    %v378 = vunpack.c.l.b16 %v158
    %v379 = vunpack.c.l.b16 %v159
    %v380 = vunpack.c.l.b16 %v160
    %v381 = vunpack.c.l.b16 %v161
    %v382 = vunpack.c.l.b16 %v162
    %v383 = vunpack.c.l.b16 %v163
    %v384 = vunpack.c.l.b16 %v164
    %v385 = vunpack.c.l.b16 %v165
    %v386 = vunpack.c.l.b16 %v166
    %v387 = vunpack.c.l.b16 %v167
    %v388 = vunpack.c.l.b16 %v168
    %v389 = vunpack.c.l.b16 %v169
    %v390 = vunpack.c.l.b16 %v170
    %v391 = vunpack.c.l.b16 %v171
    %v392 = vunpack.c.l.b16 %v172
    %v393 = vunpack.c.l.b16 %v173
    %v394 = vunpack.c.l.b16 %v174
    %v395 = vunpack.c.l.b16 %v175
    %v396 = vunpack.c.l.b16 %v176
    %v397 = vunpack.c.l.b16 %v177
    %v398 = vunpack.c.l.b16 %v178
    %v399 = vunpack.c.l.b16 %v179
    %v400 = vunpack.c.l.b16 %v180
    %v401 = vunpack.c.l.b16 %v181
    %v402 = vunpack.c.l.b16 %v182
    %v403 = vunpack.c.l.b16 %v183
    %v404 = vunpack.c.l.b16 %v184
    %v405 = vunpack.c.l.b16 %v185
    %v406 = vunpack.c.l.b16 %v186
    %v407 = vunpack.c.l.b16 %v187
    %v408 = vunpack.c.l.b16 %v188
    %v409 = vunpack.c.l.b16 %v189
    %v410 = vunpack.c.l.b16 %v190
    %v411 = vunpack.c.l.b16 %v191
    %v412 = vunpack.c.l.b16 %v192
    %v413 = vunpack.c.l.b16 %v193
    %v414 = vunpack.c.l.b16 %v194
    %v415 = vunpack.c.l.b16 %v195
    %v416 = vpack.c.b16 %v319, %v318
    %v417 = vpack.c.b16 %v321, %v320
    %v418 = vpack.c.b16 %v323, %v322
    %v419 = vpack.c.b16 %v325, %v324
    %v420 = vpack.c.b16 %v327, %v326
    %v421 = vpack.c.b16 %v329, %v328
    %v422 = vpack.c.b16 %v331, %v330
    %v423 = vpack.c.b16 %v333, %v332
    %v424 = vpack.c.b16 %v335, %v334
    %v425 = vpack.c.b16 %v337, %v336
    %v426 = vpack.c.b16 %v339, %v338
    %v427 = vpack.c.b16 %v341, %v340
    %v428 = vpack.c.b16 %v343, %v342
    %v429 = vpack.c.b16 %v345, %v344
    %v430 = vpack.c.b16 %v347, %v346
    %v431 = vpack.c.b16 %v349, %v348
    %v432 = vpack.c.b16 %v351, %v350
    %v433 = vpack.c.b16 %v353, %v352
    %v434 = vpack.c.b16 %v355, %v354
    %v435 = vpack.c.b16 %v357, %v356
    %v436 = vpack.c.b16 %v359, %v358
    %v437 = vpack.c.b16 %v361, %v360
    %v438 = vpack.c.b16 %v363, %v362
    %v439 = vpack.c.b16 %v365, %v364
    %v440 = vpack.c.b16 %v367, %v366
    %v441 = vpack.c.b16 %v369, %v368
    %v442 = vpack.c.b16 %v371, %v370
    %v443 = vpack.c.b16 %v373, %v372
    %v444 = vpack.c.b16 %v375, %v374
    %v445 = vpack.c.b16 %v377, %v376
    %v446 = vpack.c.b16 %v379, %v378
    %v447 = vpack.c.b16 %v381, %v380
    %v448 = vpack.c.b16 %v383, %v382
    %v449 = vpack.c.b16 %v385, %v384
    %v450 = vpack.c.b16 %v387, %v386
    %v451 = vpack.c.b16 %v389, %v388
    %v452 = vpack.c.b16 %v391, %v390
    %v453 = vpack.c.b16 %v393, %v392
    %v454 = vpack.c.b16 %v395, %v394
    %v455 = vpack.c.b16 %v397, %v396
    %v456 = vpack.c.b16 %v399, %v398
    %v457 = vpack.c.b16 %v401, %v400
    %v458 = vpack.c.b16 %v403, %v402
    %v459 = vpack.c.b16 %v405, %v404
    %v460 = vpack.c.b16 %v407, %v406
    %v461 = vpack.c.b16 %v409, %v408
    %v462 = vpack.c.b16 %v411, %v410
    %v463 = vpack.c.b16 %v413, %v412
    %v464 = vpack.c.b16 %v415, %v414
    %v515 = vsel %vm93, %v213, 0
    %517 = vmatpush.bf16.msra.mxu0 %v423
    %518 = vmatpush.bf16.msra.mxu0 %v422
    %519 = vmatpush.bf16.msra.mxu0 %v421
    %520 = vmatpush.bf16.msra.mxu0 %v420
    %521 = vmatpush.bf16.msra.mxu0 %v419
    %522 = vmatpush.bf16.msra.mxu0 %v418
    %523 = vmatpush.bf16.msra.mxu0 %v417
    %524 = vmatpush.bf16.msra.mxu0 %v416
    %525 = vmatmul.bf16.gmra.mxu0 %v207
    %v526 = vpop.f32.mrf.mxu0
    %v527 = vadd.f32 0.0, %v526
    %v528 = vpop.f32.mrf.mxu0
    %529 = vdwg.mxu0
    %530 = vmatpush.bf16.msra.mxu0 %v431
    %531 = vmatpush.bf16.msra.mxu0 %v430
    %532 = vmatpush.bf16.msra.mxu0 %v429
    %533 = vmatpush.bf16.msra.mxu0 %v428
    %534 = vmatpush.bf16.msra.mxu0 %v427
    %535 = vmatpush.bf16.msra.mxu0 %v426
    %536 = vmatpush.bf16.msra.mxu0 %v425
    %537 = vmatpush.bf16.msra.mxu0 %v424
    %538 = vmatmul.bf16.gmra.mxu0 %v208
    %v539 = vpop.f32.mrf.mxu0
    %v540 = vadd.f32 %v527, %v539
    %v541 = vpop.f32.mrf.mxu0
    %542 = vdwg.mxu0
    %543 = vmatpush.bf16.msra.mxu0 %v439
    %544 = vmatpush.bf16.msra.mxu0 %v438
    %545 = vmatpush.bf16.msra.mxu0 %v437
    %546 = vmatpush.bf16.msra.mxu0 %v436
    %547 = vmatpush.bf16.msra.mxu0 %v435
    %548 = vmatpush.bf16.msra.mxu0 %v434
    %549 = vmatpush.bf16.msra.mxu0 %v433
    %550 = vmatpush.bf16.msra.mxu0 %v432
    %551 = vmatmul.bf16.gmra.mxu0 %v209
    %v552 = vpop.f32.mrf.mxu0
    %v553 = vadd.f32 %v540, %v552
    %v554 = vpop.f32.mrf.mxu0
    %555 = vdwg.mxu0
    %556 = vmatpush.bf16.msra.mxu0 %v447
    %557 = vmatpush.bf16.msra.mxu0 %v446
    %558 = vmatpush.bf16.msra.mxu0 %v445
    %559 = vmatpush.bf16.msra.mxu0 %v444
    %560 = vmatpush.bf16.msra.mxu0 %v443
    %561 = vmatpush.bf16.msra.mxu0 %v442
    %562 = vmatpush.bf16.msra.mxu0 %v441
    %563 = vmatpush.bf16.msra.mxu0 %v440
    %564 = vmatmul.bf16.gmra.mxu0 %v210
    %v565 = vpop.f32.mrf.mxu0
    %v566 = vadd.f32 %v553, %v565
    %v567 = vpop.f32.mrf.mxu0
    %568 = vdwg.mxu0
    %569 = vmatpush.bf16.msra.mxu0 %v455
    %570 = vmatpush.bf16.msra.mxu0 %v454
    %571 = vmatpush.bf16.msra.mxu0 %v453
    %572 = vmatpush.bf16.msra.mxu0 %v452
    %573 = vmatpush.bf16.msra.mxu0 %v451
    %574 = vmatpush.bf16.msra.mxu0 %v450
    %575 = vmatpush.bf16.msra.mxu0 %v449
    %576 = vmatpush.bf16.msra.mxu0 %v448
    %577 = vmatmul.bf16.gmra.mxu0 %v211
    %v578 = vpop.f32.mrf.mxu0
    %v579 = vadd.f32 %v566, %v578
    %v580 = vpop.f32.mrf.mxu0
    %581 = vdwg.mxu0
    %582 = vmatpush.bf16.msra.mxu0 %v463
    %583 = vmatpush.bf16.msra.mxu0 %v462
    %584 = vmatpush.bf16.msra.mxu0 %v461
    %585 = vmatpush.bf16.msra.mxu0 %v460
    %586 = vmatpush.bf16.msra.mxu0 %v459
    %587 = vmatpush.bf16.msra.mxu0 %v458
    %588 = vmatpush.bf16.msra.mxu0 %v457
    %589 = vmatpush.bf16.msra.mxu0 %v456
    %590 = vmatmul.bf16.gmra.mxu0 %v212
    %v591 = vpop.f32.mrf.mxu0
    %v592 = vadd.f32 %v579, %v591
    %v593 = vpop.f32.mrf.mxu0
    %594 = vdwg.mxu0
    %595 = vmatpush.bf16.msra.mxu0 0
    %596 = vmatpush.bf16.msra.mxu0 0
    %597 = vmatpush.bf16.msra.mxu0 0
    %598 = vmatpush.bf16.msra.mxu0 0
    %599 = vmatpush.bf16.msra.mxu0 0
    %600 = vmatpush.bf16.msra.mxu0 0
    %601 = vmatpush.bf16.msra.mxu0 0
    %602 = vmatpush.bf16.msra.mxu0 %v464
    %603 = vmatmul.bf16.gmra.mxu0 %v515
    %v604 = vpop.f32.mrf.mxu0
    %v605 = vadd.f32 %v592, %v604
    %v606 = vpop.f32.mrf.mxu0
    %607 = vdwg.mxu0
    %v608 = vld [vmem:[%s2] sm:$0x1]
    %v610 = vperm.slane %v608, 0
    %v612 = vadd.f32 %v97, %v610
    %v613 = vadd.f32 %v612, %v605
    %v614 = vmax.f32 %v613, 0.0
    %v615 = vrsqrt.pop %v614
    %v616 = vmul.f32 %v615, %v614
    %v617 = vmul.f32 %v616, %v615
    %v618 = vmul.f32 0.5, %v617
    %v619 = vsub.f32 1.5, %v618
    %v620 = vmul.f32 %v615, %v619
    %v621 = vmul.f32 %v614, %v620
    %vm622 = vcmp.eq.f32.partialorder %v614, inf
    %v623 = vsel %vm622, %v614, %v621
    %vm624 = vcmp.eq.f32.partialorder %v614, 0.0
    %v625 = vand.u32 %v614, 2147483648
    %v626 = vsel %vm624, %v625, %v623
    %v627 = vld [vmem:[%s3] sm:$0x1]
    %v628 = vsub.f32 0.0, %v627
    %v630 = vperm.slane %v628, 0
    %v632 = vmul.f32 %v630, %v626
    %v633 = vmul.f32 %v632, 1.442695
    %v634 = vpow.pop %v633
    %v635 = vpack.c.bf16 %v634, %v634
    %v636 = vld [vmem:[#allocation7] sm:$0xf]
    %v637 = vld [vmem:[#allocation7 + $0x4] sm:$0xf]
    %v638 = vld [vmem:[#allocation7 + $0x8] sm:$0xf]
    %v639 = vld [vmem:[#allocation7 + $0xc] sm:$0xf]
    %v640 = vld [vmem:[#allocation7 + $0x10] sm:$0xf]
    %v641 = vld [vmem:[#allocation7 + $0x14] sm:$0xf]
    %v642 = vld [vmem:[#allocation7 + $0x18] sm:$0xf]
    %v643 = vld [vmem:[#allocation7 + $0x1c] sm:$0xf]
    %v644 = vld [vmem:[#allocation7 + $0x20] sm:$0xf]
    %v645 = vld [vmem:[#allocation7 + $0x24] sm:$0xf]
    %v646 = vld [vmem:[#allocation7 + $0x28] sm:$0xf]
    %v647 = vld [vmem:[#allocation7 + $0x2c] sm:$0xf]
    %v648 = vld [vmem:[#allocation7 + $0x30] sm:$0xf]
    %v649 = vld [vmem:[#allocation7 + $0x34] sm:$0xf]
    %v650 = vld [vmem:[#allocation7 + $0x38] sm:$0xf]
    %v651 = vld [vmem:[#allocation7 + $0x3c] sm:$0xf]
    %v652 = vld [vmem:[%s5] sm:$0x1]
    %v654 = vperm.slane %v652, 0
    %v672 = vunpack.c.l.b16 %v636
    %v673 = vunpack.c.l.b16 %v637
    %v674 = vunpack.c.l.b16 %v638
    %v675 = vunpack.c.l.b16 %v639
    %v676 = vunpack.c.l.b16 %v640
    %v677 = vunpack.c.l.b16 %v641
    %v678 = vunpack.c.l.b16 %v642
    %v679 = vunpack.c.l.b16 %v643
    %v680 = vunpack.c.l.b16 %v644
    %v681 = vunpack.c.l.b16 %v645
    %v682 = vunpack.c.l.b16 %v646
    %v683 = vunpack.c.l.b16 %v647
    %v684 = vunpack.c.l.b16 %v648
    %v685 = vunpack.c.l.b16 %v649
    %v686 = vunpack.c.l.b16 %v650
    %v687 = vunpack.c.l.b16 %v651
    %v688 = vpack.c.b16 %v673, %v672
    %v689 = vpack.c.b16 %v675, %v674
    %v690 = vpack.c.b16 %v677, %v676
    %v691 = vpack.c.b16 %v679, %v678
    %v692 = vpack.c.b16 %v681, %v680
    %v693 = vpack.c.b16 %v683, %v682
    %v694 = vpack.c.b16 %v685, %v684
    %v695 = vpack.c.b16 %v687, %v686
    %704 = vmatpush.bf16.msra.mxu0 %v695
    %705 = vmatpush.bf16.msra.mxu0 %v694
    %706 = vmatpush.bf16.msra.mxu0 %v693
    %707 = vmatpush.bf16.msra.mxu0 %v692
    %708 = vmatpush.bf16.msra.mxu0 %v691
    %709 = vmatpush.bf16.msra.mxu0 %v690
    %710 = vmatpush.bf16.msra.mxu0 %v689
    %711 = vmatpush.bf16.msra.mxu0 %v688
    %712 = vmatmul.bf16.gmra.mxu0 %v635
    %v713 = vpop.f32.mrf.mxu0
    %v714 = vadd.f32 %v654, %v713
    %v715 = vpop.f32.mrf.mxu0
    %716 = vdwg.mxu0
    %717 = vst [vmem:[#allocation8] sm:$0xff] %v714
    // Predicated region
    $region38: #{tpu_custom_call.1} parent=1 // pred_check
      _
    $region39: #{tpu_custom_call.1} parent=1 // pred_check_branch
      %719 = sbr.rel (0) target = $region41
    $region40: #{tpu_custom_call.1} parent=1 // pred_region
      %721 = vsyncadd [#allocation4], 0
      %s723 = sshll.u32 [#allocation8], 4
      %s724 = int_to_ptr.vmem [resolvable:$true] %s723
      %s725 = sshll.u32 %s6, 4
      %s726 = int_to_ptr.hbm [resolvable:$true] %s725
      %728 = dma.vmem_to_hbm [thread:$0]  %s724, 128, %s726, [#allocation4]
    $region41: #{tpu_custom_call.1} parent=1 // pred_fallthru
      _
    // Predicated region
    $region42: #{tpu_custom_call.1} parent=1 // pred_check
      _
    $region43: #{tpu_custom_call.1} parent=1 // pred_check_branch
      %730 = sbr.rel (0) target = $region45
    $region44: #{tpu_custom_call.1} parent=1 // pred_region
      %732 = dma.done [#allocation4], 128
    $region45: #{tpu_custom_call.1} parent=1 // pred_fallthru
      _
    %733 = vsyncpa [#allocation3], 1
    %734 = vsyncpa [#allocation6], 1
    %735 = vsyncpa [#allocation4], 1

</llo_original>
